<compile_context>
chip_gen: v6e
topology: v6e:2x2x1
jax: 0.10.0
libtpu: 0.0.40
codegen_flags: <defaults>
</compile_context>

<pallas_src>
import functools

import jax
import jax.numpy as jnp
from jax import lax
from jax.experimental import pallas as pl
from jax.experimental.pallas import tpu as pltpu

_LANE = 128
_ACC_TARGET = 2048          # target accumulator width (f32 lanes)


def _round_up(v, m):
    return (v + m - 1) // m * m


def _omnivore_kernel(x_ref, wt_ref, bt_ref, wh_ref, bh_ref, o_ref, acc_ref, *,
                     n_valid, n_total, tile_n, acc_width, num_folds, needs_mask):
    """Streaming mean over the (packed) spatial axis, fused projection + head.

    x_ref  : (1, R, tile_n)   spatial tile of one batch element (sublane-packed)
    wt_ref : (R, D)           trunk (1x1x1 conv) weight, row-repeated to packed rows
    bt_ref : (1, D)           trunk bias
    wh_ref : (D, Kp)          head weight (lane-padded)
    bh_ref : (1, Kp)          head bias   (lane-padded)
    o_ref  : (1, 1, Kp)       logits for this batch element
    acc_ref: (R, acc_width)   small fixed-width f32 running sum

    The spatial-reduction axis must be the innermost grid axis (the wrapper
    guarantees grid=(B, n_steps)).
    """
    n = pl.program_id(1)
    last = pl.num_programs(1) - 1

    def tile_partial(masked):
        # Fold the (R, tile_n) tile down to (R, acc_width) with VPU adds,
        # carrying the partial in values (acc_ref touched once per step).
        def chunk(i):
            start = i * acc_width
            if not isinstance(i, int):
                start = pl.multiple_of(start, acc_width)
            c = x_ref[0, :, pl.ds(start, acc_width)].astype(jnp.float32)
            if masked:
                pos = (n * tile_n + i * acc_width
                       + lax.broadcasted_iota(jnp.int32, c.shape, 1))
                c = jnp.where(pos < n_valid, c, 0.0)
            return c

        p = chunk(0)
        if num_folds > 1:
            p = lax.fori_loop(1, num_folds, lambda i, a: a + chunk(i), p,
                              unroll=min(num_folds - 1, 8))
        return p

    @pl.when(n == 0)
    def _init():
        acc_ref[...] = jnp.zeros_like(acc_ref)

    if needs_mask:
        # Only the final (ragged) tile pays the iota/compare/select cost.
        @pl.when(n != last)
        def _accum_body():
            acc_ref[...] += tile_partial(False)

        @pl.when(n == last)
        def _accum_tail():
            acc_ref[...] += tile_partial(True)
    else:
        acc_ref[...] += tile_partial(False)

    @pl.when(n == last)
    def _finalize():
        # Single small cross-lane reduce per batch element (acc_width lanes).
        row_sum = jnp.sum(acc_ref[...], axis=-1, keepdims=True)            # (R, 1)
        mean_rows = row_sum * (1.0 / n_total)
        # trunk 1x1x1 conv applied to the pooled vector (valid by linearity);
        # packed rows fold back to channels because wt is row-repeated.
        feat = jnp.sum(mean_rows * wt_ref[...], axis=0, keepdims=True) + bt_ref[...]  # (1, D)
        logits = jnp.dot(feat, wh_ref[...],
                         preferred_element_type=jnp.float32) + bh_ref[...]            # (1, Kp)
        o_ref[...] = logits[None].astype(o_ref.dtype)


def omnivore_forward(x_ncthw, params, input_type="video"):
    """x_ncthw: (B, C, T, H, W).  Returns logits (B, num_classes)."""
    assert x_ncthw.ndim == 5
    B, C, T, H, W = x_ncthw.shape
    N = T * H * W

    wt, bt = params["trunk"]                       # (C, D), (1, D)
    assert input_type in ("image", "video", "rgbd"), "unsupported input type"
    wh, bh = params["heads"][input_type]           # (D, K), (1, K)
    D = wt.shape[1]
    K = wh.shape[1]

    itemsize = jnp.dtype(x_ncthw.dtype).itemsize
    sub = max(1, 32 // itemsize)                   # sublanes per vreg: 8 f32, 16 bf16

    # --- sublane packing: (B, C, N) -> (B, C*s, N//s) (free row-major reshape) ---
    s = 1
    if C < sub:
        for cand in range(sub // C, 0, -1):
            if N % cand == 0:
                s = cand
                break
    R = C * s
    Np = N // s
    x = x_ncthw.reshape(B, R, Np)

    # trunk weight expanded so packed row r maps to channel r // s
    wt_p = jnp.repeat(wt, s, axis=0) if s > 1 else wt          # (R, D)

    # lane-pad the head so the final store is lane-dense / unmasked
    Kp = _round_up(max(K, 1), _LANE)
    wh_p = jnp.zeros((D, Kp), wh.dtype).at[:, :K].set(wh)
    bh_p = jnp.zeros((1, Kp), bh.dtype).at[:, :K].set(bh)

    # --- per-generation VMEM budget (padded-sublane aware) ---
    try:
        vmem_cap = int(pltpu.get_tpu_info().vmem_capacity_bytes)
    except Exception:
        vmem_cap = 64 * 1024 * 1024                # conservative (v7x-sized)
    vmem_limit = min(vmem_cap * 3 // 4, 100 * 1024 * 1024)     # ~96 MiB v5e/v6e, ~48 MiB v7x
    vmem_limit = max(vmem_limit, 16 * 1024 * 1024)
    R_pad = _round_up(R, sub)                      # Mosaic sublane padding of the x block
    # two pipelined x buffers dominate residency; keep them to ~2/3 of the limit
    per_block_budget = min(vmem_limit // 3, 32 * 1024 * 1024)
    max_tile = max(_LANE, per_block_budget // (R_pad * itemsize) // _LANE * _LANE)

    # --- spatial tile: prefer a lane-aligned divisor of Np (no per-step mask) ---
    if Np <= max_tile:
        tile_n, needs_mask = Np, False             # full-extent block
    else:
        tile_n = 0
        t = max_tile
        while t >= _LANE:
            if Np % t == 0:
                tile_n = t
                break
            t -= _LANE
        if tile_n:
            needs_mask = False
        else:
            tile_n, needs_mask = max_tile, True    # mask only on the last step
    n_steps = pl.cdiv(Np, tile_n)

    # fixed-width accumulator: largest divisor of tile_n that is <= _ACC_TARGET
    if tile_n % _LANE == 0:
        acc_width = _LANE
        w = 2 * _LANE
        while w <= min(_ACC_TARGET, tile_n):
            if tile_n % w == 0:
                acc_width = w
            w += _LANE
    else:
        acc_width = tile_n                         # small full-extent block
    num_folds = tile_n // acc_width

    kernel = functools.partial(
        _omnivore_kernel, n_valid=Np, n_total=N, tile_n=tile_n,
        acc_width=acc_width, num_folds=num_folds, needs_mask=needs_mask)

    cost = pl.CostEstimate(
        flops=2 * B * (R * Np + R * D + D * Kp),
        transcendentals=0,
        bytes_accessed=(B * R * Np * itemsize
                        + 4 * (R * D + D + D * Kp + Kp)
                        + B * Kp * 4))

    # TODO(synk): for B < 2 on v7x, split the spatial reduction over the two
    # TensorCores (per-chunk partial sums + a tiny combine) to use both cores.
    out = pl.pallas_call(
        kernel,
        out_shape=jax.ShapeDtypeStruct((B, 1, Kp), jnp.float32),
        grid_spec=pltpu.PrefetchScalarGridSpec(
            num_scalar_prefetch=0,
            grid=(B, n_steps),                     # B parallel; reduction innermost
            in_specs=[
                pl.BlockSpec((1, R, tile_n), lambda b, n: (b, 0, n)),
                pl.BlockSpec((R, D), lambda b, n: (0, 0)),
                pl.BlockSpec((1, D), lambda b, n: (0, 0)),
                pl.BlockSpec((D, Kp), lambda b, n: (0, 0)),
                pl.BlockSpec((1, Kp), lambda b, n: (0, 0)),
            ],
            out_specs=pl.BlockSpec((1, 1, Kp), lambda b, n: (b, 0, 0)),
            scratch_shapes=[pltpu.VMEM((R, acc_width), jnp.float32)],
        ),
        compiler_params=pltpu.CompilerParams(
            dimension_semantics=("parallel", "arbitrary"),
            vmem_limit_bytes=int(vmem_limit),
        ),
        cost_estimate=cost,
    )(x, wt_p, bt, wh_p, bh_p)

    return out.reshape(B, Kp)[:, :K]


def make_params(key, C, D, K):
    """Deterministic synthetic weights for trunk + 3 modality heads."""
    ks = jax.random.split(key, 8)
    trunk_w = jax.random.normal(ks[0], (C, D), jnp.float32) * 0.1
    trunk_b = jax.random.normal(ks[1], (1, D), jnp.float32) * 0.1
    heads = {}
    for i, name in enumerate(["image", "video", "rgbd"]):
        hw = jax.random.normal(ks[2 + 2 * i], (D, K), jnp.float32) * 0.1
        hb = jax.random.normal(ks[3 + 2 * i], (1, K), jnp.float32) * 0.1
        heads[name] = (hw, hb)
    return {"trunk": (trunk_w, trunk_b), "heads": heads}


def _reference(x_ncthw, params, input_type):
    # un-fused order (trunk conv per voxel -> mean -> head), matching PyTorch
    wt, bt = params["trunk"]
    wh, bh = params["heads"][input_type]
    B, C, T, H, W = x_ncthw.shape
    xl = jnp.transpose(x_ncthw, (0, 2, 3, 4, 1)).reshape(B, T * H * W, C)
    trunk_out = jnp.einsum("bnc,cd->bnd", xl, wt) + bt       # 1x1x1 conv trunk
    feats = jnp.mean(trunk_out, axis=1)                      # mean over T,H,W
    return feats @ wh + bh                                   # selected head


if __name__ == "__main__":
    # small shapes consistent with 1 x C x T x H x W video-style input
    B, C, T, H, W = 2, 4, 4, 16, 16
    D, K = 32, 8

    key = jax.random.PRNGKey(0)
    kx, kp = jax.random.split(key)
    x = jax.random.normal(kx, (B, C, T, H, W), jnp.float32)
    params = make_params(kp, C, D, K)

    # TODO(synk): a general (non-linear) trunk such as the real Omnivore Swin
    # backbone cannot use the mean-first rewrite; this kernel covers the
    # linear (1x1x1 conv) trunk instantiation only.
    fwd = jax.jit(omnivore_forward, static_argnames=("input_type",))
    logits = jax.block_until_ready(fwd(x, params, input_type="video"))

    ref = _reference(x, params, "video")
    assert logits.shape == (B, K)
    assert jnp.allclose(logits, ref, atol=1e-4, rtol=1e-4)

    print("KERNEL_OK")
</pallas_src>

<mosaic_0001>
module attributes {stable_mosaic.version = 11 : i64} {
  func.func @_omnivore_kernel(%arg0: i32, %arg1: i32, %arg2: memref<1x8x512xf32, #tpu.memory_space<vmem>>, %arg3: memref<8x32xf32, #tpu.memory_space<vmem>>, %arg4: memref<1x32xf32, #tpu.memory_space<vmem>>, %arg5: memref<32x128xf32, #tpu.memory_space<vmem>>, %arg6: memref<1x128xf32, #tpu.memory_space<vmem>>, %arg7: memref<1x1x128xf32, #tpu.memory_space<vmem>>, %arg8: memref<8x512xf32, #tpu.memory_space<vmem>>) attributes {dimension_semantics = [#tpu.dimension_semantics<parallel>, #tpu.dimension_semantics<arbitrary>], iteration_bounds = array<i64: 2, 1>, scalar_prefetch = 0 : i64, scratch_operands = 1 : i64, tpu.core_type = #tpu.core_type<tc>, window_params = [{transform_indices = @transform_0, window_bounds = array<i64: 1, 8, 512>}, {pipeline_mode = #tpu.pipeline_mode<synchronous>, transform_indices = @transform_1, window_bounds = array<i64: 8, 32>}, {pipeline_mode = #tpu.pipeline_mode<synchronous>, transform_indices = @transform_2, window_bounds = array<i64: 1, 32>}, {pipeline_mode = #tpu.pipeline_mode<synchronous>, transform_indices = @transform_3, window_bounds = array<i64: 32, 128>}, {pipeline_mode = #tpu.pipeline_mode<synchronous>, transform_indices = @transform_4, window_bounds = array<i64: 1, 128>}, {transform_indices = @transform_5, window_bounds = array<i64: 1, 1, 128>}]} {
    %c0_i32 = arith.constant 0 : i32
    %0 = arith.cmpi eq, %arg1, %c0_i32 : i32
    %1 = arith.extui %0 : i1 to i32
    %c0_i32_0 = arith.constant 0 : i32
    %2 = arith.cmpi ne, %1, %c0_i32_0 : i32
    scf.if %2 {
      %cst = arith.constant 0.000000e+00 : f32
      %11 = vector.broadcast %cst : f32 to vector<8x512xf32>
      %c0_9 = arith.constant 0 : index
      %c0_10 = arith.constant 0 : index
      %12 = vector.load %arg8[%c0_9, %c0_10] : memref<8x512xf32, #tpu.memory_space<vmem>>, vector<8x512xf32>
      tpu.vector_store %arg8[%c0_9, %c0_10], %11 {strides = array<i32>} : memref<8x512xf32, #tpu.memory_space<vmem>>, vector<8x512xf32>,
    } else {
    }
    %c0 = arith.constant 0 : index
    %c0_1 = arith.constant 0 : index
    %3 = vector.load %arg8[%c0, %c0_1] : memref<8x512xf32, #tpu.memory_space<vmem>>, vector<8x512xf32>
    %c0_2 = arith.constant 0 : index
    %c0_3 = arith.constant 0 : index
    %c0_4 = arith.constant 0 : index
    %4 = vector.load %arg2[%c0_2, %c0_3, %c0_4] : memref<1x8x512xf32, #tpu.memory_space<vmem>>, vector<1x8x512xf32>
    %5 = vector.shape_cast %4 : vector<1x8x512xf32> to vector<8x512xf32>
    %6 = arith.addf %3, %5 : vector<8x512xf32>
    %c0_5 = arith.constant 0 : index
    %c0_6 = arith.constant 0 : index
    %7 = vector.load %arg8[%c0_5, %c0_6] : memref<8x512xf32, #tpu.memory_space<vmem>>, vector<8x512xf32>
    tpu.vector_store %arg8[%c0_5, %c0_6], %6 {strides = array<i32>} : memref<8x512xf32, #tpu.memory_space<vmem>>, vector<8x512xf32>,
    %c0_i32_7 = arith.constant 0 : i32
    %8 = arith.cmpi eq, %arg1, %c0_i32_7 : i32
    %9 = arith.extui %8 : i1 to i32
    %c0_i32_8 = arith.constant 0 : i32
    %10 = arith.cmpi ne, %9, %c0_i32_8 : i32
    scf.if %10 {
      %c0_9 = arith.constant 0 : index
      %c0_10 = arith.constant 0 : index
      %11 = vector.load %arg8[%c0_9, %c0_10] : memref<8x512xf32, #tpu.memory_space<vmem>>, vector<8x512xf32>
      %cst = arith.constant dense<0.000000e+00> : vector<8xf32>
      %12 = vector.multi_reduction <add>, %11, %cst [1] : vector<8x512xf32> to vector<8xf32>
      %13 = vector.shape_cast %12 : vector<8xf32> to vector<8x1xf32>
      %cst_11 = arith.constant 9.765625E-4 : f32
      %14 = vector.broadcast %cst_11 : f32 to vector<8x1xf32>
      %15 = arith.mulf %13, %14 : vector<8x1xf32>
      %c0_12 = arith.constant 0 : index
      %c0_13 = arith.constant 0 : index
      %16 = vector.load %arg3[%c0_12, %c0_13] : memref<8x32xf32, #tpu.memory_space<vmem>>, vector<8x32xf32>
      %17 = vector.broadcast %15 : vector<8x1xf32> to vector<8x32xf32>
      %18 = arith.mulf %17, %16 : vector<8x32xf32>
      %cst_14 = arith.constant dense<0.000000e+00> : vector<32xf32>
      %19 = vector.multi_reduction <add>, %18, %cst_14 [0] : vector<8x32xf32> to vector<32xf32>
      %20 = vector.shape_cast %19 : vector<32xf32> to vector<1x32xf32>
      %c0_15 = arith.constant 0 : index
      %c0_16 = arith.constant 0 : index
      %21 = vector.load %arg4[%c0_15, %c0_16] : memref<1x32xf32, #tpu.memory_space<vmem>>, vector<1x32xf32>
      %22 = arith.addf %20, %21 : vector<1x32xf32>
      %c0_17 = arith.constant 0 : index
      %c0_18 = arith.constant 0 : index
      %23 = vector.load %arg5[%c0_17, %c0_18] : memref<32x128xf32, #tpu.memory_space<vmem>>, vector<32x128xf32>
      %cst_19 = arith.constant dense<0.000000e+00> : vector<1x128xf32>
      %24 = tpu.matmul %22, %23, %cst_19 {dimension_numbers = #tpu.dot_dimension_numbers<[1], [0], [0], [1], [0, 0, 1, 1], [], []>} : vector<1x32xf32>, vector<32x128xf32>, vector<1x128xf32> -> vector<1x128xf32>
      %c0_20 = arith.constant 0 : index
      %c0_21 = arith.constant 0 : index
      %25 = vector.load %arg6[%c0_20, %c0_21] : memref<1x128xf32, #tpu.memory_space<vmem>>, vector<1x128xf32>
      %26 = arith.addf %24, %25 : vector<1x128xf32>
      %27 = vector.shape_cast %26 : vector<1x128xf32> to vector<1x1x128xf32>
      %c0_22 = arith.constant 0 : index
      %c0_23 = arith.constant 0 : index
      %c0_24 = arith.constant 0 : index
      %28 = vector.load %arg7[%c0_22, %c0_23, %c0_24] : memref<1x1x128xf32, #tpu.memory_space<vmem>>, vector<1x1x128xf32>
      tpu.vector_store %arg7[%c0_22, %c0_23, %c0_24], %27 {strides = array<i32>} : memref<1x1x128xf32, #tpu.memory_space<vmem>>, vector<1x1x128xf32>,
    } else {
    }
    return
  }
  func.func @transform_0(%arg0: i32, %arg1: i32) -> (i32, i32, i32) {
    %c0_i32 = arith.constant 0 : i32
    %c0_i32_0 = arith.constant 0 : i32
    return %arg0, %c0_i32, %arg1 : i32, i32, i32
  }
  func.func @transform_1(%arg0: i32, %arg1: i32) -> (i32, i32) {
    %c0_i32 = arith.constant 0 : i32
    %c0_i32_0 = arith.constant 0 : i32
    %c0_i32_1 = arith.constant 0 : i32
    return %c0_i32, %c0_i32_0 : i32, i32
  }
  func.func @transform_2(%arg0: i32, %arg1: i32) -> (i32, i32) {
    %c0_i32 = arith.constant 0 : i32
    %c0_i32_0 = arith.constant 0 : i32
    %c0_i32_1 = arith.constant 0 : i32
    return %c0_i32, %c0_i32_0 : i32, i32
  }
  func.func @transform_3(%arg0: i32, %arg1: i32) -> (i32, i32) {
    %c0_i32 = arith.constant 0 : i32
    %c0_i32_0 = arith.constant 0 : i32
    %c0_i32_1 = arith.constant 0 : i32
    return %c0_i32, %c0_i32_0 : i32, i32
  }
  func.func @transform_4(%arg0: i32, %arg1: i32) -> (i32, i32) {
    %c0_i32 = arith.constant 0 : i32
    %c0_i32_0 = arith.constant 0 : i32
    %c0_i32_1 = arith.constant 0 : i32
    return %c0_i32, %c0_i32_0 : i32, i32
  }
  func.func @transform_5(%arg0: i32, %arg1: i32) -> (i32, i32, i32) {
    %c0_i32 = arith.constant 0 : i32
    %c0_i32_0 = arith.constant 0 : i32
    %c0_i32_1 = arith.constant 0 : i32
    return %arg0, %c0_i32, %c0_i32_0 : i32, i32, i32
  }
}

</mosaic_0001>

<llo_original>
// kernel: omnivore_forward.1
$region0: #{omnivore_forward.1}
  #allocation0 [shape = 'u32[]', space=smem, size = 0x4, offset = 0x4, fixed_abs, tag = 'smem constant byte address 0x4 - core index']
  #allocation1 [shape = 'u32[144,128]{1,0:T(1,128)}', space=vmem, size = 0x12000, scoped, tag = 'internal scratch']
  #allocation2 [shape = 'f32[8,512]{1,0:T(8,128)}', space=vmem, size = 0x4000, scoped, tag = 'scratch operand']
  %s0 = inlined_call_operand.vmem [shape: f32[2,8,512], index: 0, kind: input, shape index: {}]
  %s1 = inlined_call_operand.vmem [shape: f32[8,32], index: 1, kind: input, shape index: {}]
  %s2 = inlined_call_operand.vmem [shape: f32[1,32], index: 2, kind: input, shape index: {}]
  %s3 = inlined_call_operand.vmem [shape: f32[32,128], index: 3, kind: input, shape index: {}]
  %s4 = inlined_call_operand.vmem [shape: f32[1,128], index: 4, kind: input, shape index: {}]
  %s5 = inlined_call_operand.hbm [shape: f32[2,1,128], index: 5, kind: output, shape index: {}]
  %s6 = sld [smem:[#allocation0]]
  $region61: #{omnivore_forward.1} parent=0
    _
  %s8 = ssub.s32 1, %s6
  %s9 = scalar_select 0, %s8, %s6
  $region1: #{omnivore_forward.1} parent=0
    #allocation3 [shape = 'u8[1024]{0}', space=vmem, size = 0x400, scoped, tag = 'output window, operand 0']
    #allocation4 [shape = 's32[2]{0}', space=sflag, size = 0x8, scoped, tag = 'scoped memory for omnivore_forward.1']
    %10 = vsyncpa [#allocation4], 0
    %s11 = scalar_lea.sflag [#allocation4], 1
    %12 = vsyncpa %s11, 0
    loop: start=0, step=1, limit=4
    $region2: #{omnivore_forward.1} parent=1 // loop_pre_header
      _
    $region3: #{omnivore_forward.1} parent=1 // loop_header
      %s14 = sphi 0, %s18
      %p15 = scmp.ge.s32.totalorder %s14, 4
      %s21 = sphi 0, %s33
      %s22 = sphi 0, %s29
      %s23 = sphi 0, %s21
      %s24 = sphi 0, %s22
      %s25 = sphi 0, %s23
      %s26 = sphi 0, %s24
      %s38 = sphi 0, %s40
      %s41 = sphi 0, %s38
      %s42 = sphi 0, %s41
      %s58 = sphi 0, %s42
      %s62 = sphi 0, %s62
      %s64 = sphi 0, %s62
      %s65 = sphi 0, %s64
      %s79 = sphi 0, %s65
      %s83 = sphi 0, %s83
      %s85 = sphi 0, %s83
      %s86 = sphi 0, %s85
      %s100 = sphi 0, %s86
      %s104 = sphi 0, %s104
      %s106 = sphi 0, %s104
      %s107 = sphi 0, %s106
      %s121 = sphi 0, %s107
      %s125 = sphi 0, %s125
      %s127 = sphi 0, %s125
      %s128 = sphi 0, %s127
      %s142 = sphi 0, %s128
      %s148 = sphi 0, %s150
      %s151 = sphi 0, %s148
      %s152 = sphi 0, %s151
      %s168 = sphi 0, %s152
    $region4: #{omnivore_forward.1} parent=1 // loop_header_branch
      %17 = sbr.rel (%p15) target = $region8
    $region5: #{omnivore_forward.1} parent=1 // loop_body
      %s19 = ssub.s32 %s14, 1
      %s20 = ssub.s32 %s14, 2
      %s27 = sadd.s32 1, %s22
      %p28 = scmp.ge.s32.totalorder %s27, 1
      %s29 = scalar_select %p28, 0, %s27
      %s30 = sadd.s32 1, %s21
      %s31 = scalar_select %p28, %s30, %s21
      %p32 = scmp.ge.s32.totalorder %s31, 2
      %s33 = scalar_select %p32, 0, %s31
      %s34 = ssub.s32 %s21, %s33
      %s35 = ssub.s32 %s22, %s29
      %s36 = sor.u32 %s34, %s35
      %p37 = scmp.eq.s32.totalorder %s36, 0
      %s39 = sadd.s32 %s38, 1
      %s40 = scalar_select %p37, %s38, %s39
      %p43 = pneg %p37
      %p44 = scmp.eq.s32.totalorder %s14, 1
      %p45 = por %p43, %p44
      %p46 = scmp.ne.s32.totalorder %s38, %s41
      %p47 = scmp.eq.s32.totalorder %s14, 0
      %p48 = por %p46, %p47
      %p49 = scmp.ne.s32.totalorder %s38, %s41
      %p50 = scmp.eq.s32.totalorder %s19, 1
      %p51 = por %p49, %p50
      %p52 = scmp.ne.s32.totalorder %s41, %s42
      %p53 = scmp.eq.s32.totalorder %s19, 0
      %p54 = por %p52, %p53
      %p55 = scmp.ne.s32.totalorder %s41, %s42
      %p56 = scmp.eq.s32.totalorder %s20, 1
      %p57 = por %p55, %p56
      %p59 = scmp.ne.s32.totalorder %s42, %s58
      %p60 = scmp.eq.s32.totalorder %s20, 0
      %p61 = por %p59, %p60
      %s63 = sadd.s32 %s62, 1
      %p66 = scmp.eq.s32.totalorder %s14, 1
      %p67 = scmp.ne.s32.totalorder %s62, %s64
      %p68 = scmp.eq.s32.totalorder %s14, 0
      %p69 = por %p67, %p68
      %p70 = scmp.ne.s32.totalorder %s62, %s64
      %p71 = scmp.eq.s32.totalorder %s19, 1
      %p72 = por %p70, %p71
      %p73 = scmp.ne.s32.totalorder %s64, %s65
      %p74 = scmp.eq.s32.totalorder %s19, 0
      %p75 = por %p73, %p74
      %p76 = scmp.ne.s32.totalorder %s64, %s65
      %p77 = scmp.eq.s32.totalorder %s20, 1
      %p78 = por %p76, %p77
      %p80 = scmp.ne.s32.totalorder %s65, %s79
      %p81 = scmp.eq.s32.totalorder %s20, 0
      %p82 = por %p80, %p81
      %s84 = sadd.s32 %s83, 1
      %p87 = scmp.eq.s32.totalorder %s14, 1
      %p88 = scmp.ne.s32.totalorder %s83, %s85
      %p89 = scmp.eq.s32.totalorder %s14, 0
      %p90 = por %p88, %p89
      %p91 = scmp.ne.s32.totalorder %s83, %s85
      %p92 = scmp.eq.s32.totalorder %s19, 1
      %p93 = por %p91, %p92
      %p94 = scmp.ne.s32.totalorder %s85, %s86
      %p95 = scmp.eq.s32.totalorder %s19, 0
      %p96 = por %p94, %p95
      %p97 = scmp.ne.s32.totalorder %s85, %s86
      %p98 = scmp.eq.s32.totalorder %s20, 1
      %p99 = por %p97, %p98
      %p101 = scmp.ne.s32.totalorder %s86, %s100
      %p102 = scmp.eq.s32.totalorder %s20, 0
      %p103 = por %p101, %p102
      %s105 = sadd.s32 %s104, 1
      %p108 = scmp.eq.s32.totalorder %s14, 1
      %p109 = scmp.ne.s32.totalorder %s104, %s106
      %p110 = scmp.eq.s32.totalorder %s14, 0
      %p111 = por %p109, %p110
      %p112 = scmp.ne.s32.totalorder %s104, %s106
      %p113 = scmp.eq.s32.totalorder %s19, 1
      %p114 = por %p112, %p113
      %p115 = scmp.ne.s32.totalorder %s106, %s107
      %p116 = scmp.eq.s32.totalorder %s19, 0
      %p117 = por %p115, %p116
      %p118 = scmp.ne.s32.totalorder %s106, %s107
      %p119 = scmp.eq.s32.totalorder %s20, 1
      %p120 = por %p118, %p119
      %p122 = scmp.ne.s32.totalorder %s107, %s121
      %p123 = scmp.eq.s32.totalorder %s20, 0
      %p124 = por %p122, %p123
      %s126 = sadd.s32 %s125, 1
      %p129 = scmp.eq.s32.totalorder %s14, 1
      %p130 = scmp.ne.s32.totalorder %s125, %s127
      %p131 = scmp.eq.s32.totalorder %s14, 0
      %p132 = por %p130, %p131
      %p133 = scmp.ne.s32.totalorder %s125, %s127
      %p134 = scmp.eq.s32.totalorder %s19, 1
      %p135 = por %p133, %p134
      %p136 = scmp.ne.s32.totalorder %s127, %s128
      %p137 = scmp.eq.s32.totalorder %s19, 0
      %p138 = por %p136, %p137
      %p139 = scmp.ne.s32.totalorder %s127, %s128
      %p140 = scmp.eq.s32.totalorder %s20, 1
      %p141 = por %p139, %p140
      %p143 = scmp.ne.s32.totalorder %s128, %s142
      %p144 = scmp.eq.s32.totalorder %s20, 0
      %p145 = por %p143, %p144
      %s146 = ssub.s32 %s21, %s33
      %p147 = scmp.eq.s32.totalorder %s146, 0
      %s149 = sadd.s32 %s148, 1
      %s150 = scalar_select %p147, %s148, %s149
      %p153 = pneg %p147
      %p154 = scmp.eq.s32.totalorder %s14, 1
      %p155 = por %p153, %p154
      %p156 = scmp.ne.s32.totalorder %s148, %s151
      %p157 = scmp.eq.s32.totalorder %s14, 0
      %p158 = por %p156, %p157
      %p159 = scmp.ne.s32.totalorder %s148, %s151
      %p160 = scmp.eq.s32.totalorder %s19, 1
      %p161 = por %p159, %p160
      %p162 = scmp.ne.s32.totalorder %s151, %s152
      %p163 = scmp.eq.s32.totalorder %s19, 0
      %p164 = por %p162, %p163
      %p165 = scmp.ne.s32.totalorder %s151, %s152
      %p166 = scmp.eq.s32.totalorder %s20, 1
      %p167 = por %p165, %p166
      %p169 = scmp.ne.s32.totalorder %s152, %s168
      %p170 = scmp.eq.s32.totalorder %s20, 0
      %p171 = por %p169, %p170
      %p172 = scmp.le.s32.totalorder 1, %s14
      %p173 = scmp.lt.s32.totalorder %s14, 3
      %p174 = pnand %p172, %p173
      %p175 = pneg %p174
      // Predicated region
      $region9: #{omnivore_forward.1} parent=5 // pred_check
        _
      $region10: #{omnivore_forward.1} parent=5 // pred_check_branch
        %177 = sbr.rel (%p174) target = $region12
      $region11: #{omnivore_forward.1} parent=5 // pred_region
        %s178 = ssub.s32 %s14, 1
        // Predicated region
        $region13: #{omnivore_forward.1} parent=11 // pred_check
          %p179 = pneg %p75
        $region14: #{omnivore_forward.1} parent=11 // pred_check_branch
          %181 = sbr.rel (%p179) target = $region16
        $region15: #{omnivore_forward.1} parent=11 // pred_region
          _
        $region16: #{omnivore_forward.1} parent=11 // pred_fallthru
          _
        // Predicated region
        $region17: #{omnivore_forward.1} parent=11 // pred_check
          %p182 = pneg %p96
        $region18: #{omnivore_forward.1} parent=11 // pred_check_branch
          %184 = sbr.rel (%p182) target = $region20
        $region19: #{omnivore_forward.1} parent=11 // pred_region
          _
        $region20: #{omnivore_forward.1} parent=11 // pred_fallthru
          _
        // Predicated region
        $region21: #{omnivore_forward.1} parent=11 // pred_check
          %p185 = pneg %p117
        $region22: #{omnivore_forward.1} parent=11 // pred_check_branch
          %187 = sbr.rel (%p185) target = $region24
        $region23: #{omnivore_forward.1} parent=11 // pred_region
          _
        $region24: #{omnivore_forward.1} parent=11 // pred_fallthru
          _
        // Predicated region
        $region25: #{omnivore_forward.1} parent=11 // pred_check
          %p188 = pneg %p138
        $region26: #{omnivore_forward.1} parent=11 // pred_check_branch
          %190 = sbr.rel (%p188) target = $region28
        $region27: #{omnivore_forward.1} parent=11 // pred_region
          _
        $region28: #{omnivore_forward.1} parent=11 // pred_fallthru
          _
      $region12: #{omnivore_forward.1} parent=5 // pred_fallthru
        _
      %p191 = scmp.lt.s32.totalorder %s14, 2
      // Predicated region
      $region29: #{omnivore_forward.1} parent=5 // pred_check
        %p192 = pneg %p191
      $region30: #{omnivore_forward.1} parent=5 // pred_check_branch
        %194 = sbr.rel (%p192) target = $region32
      $region31: #{omnivore_forward.1} parent=5 // pred_region
        // Predicated region
        $region33: #{omnivore_forward.1} parent=31 // pred_check
          %p195 = pneg %p48
        $region34: #{omnivore_forward.1} parent=31 // pred_check_branch
          %197 = sbr.rel (%p195) target = $region36
        $region35: #{omnivore_forward.1} parent=31 // pred_region
          %s198 = smul.u32 4, %s22
          %p199 = scmp.lt.s32.totalorder %s21, 1
          %s200 = scalar_select %p199, %s21, 1
          %p201 = scmp.lt.s32.totalorder %s198, 3
          %s202 = scalar_select %p201, %s198, 3
          %s203 = smul.addr %s200, 4
          %s204 = sadd.s32 %s202, %s203
          %s205 = smul.addr %s204, 8
          %s206 = scalar_lea.vmem %s0, %s205
          %s207 = smul.u32 4, %s22
        $region36: #{omnivore_forward.1} parent=31 // pred_fallthru
          _
      $region32: #{omnivore_forward.1} parent=5 // pred_fallthru
        _
      %p208 = scmp.le.s32.totalorder 1, %s14
      %p209 = scmp.lt.s32.totalorder %s14, 3
      %p210 = pnand %p208, %p209
      %p211 = pneg %p210
      // Predicated region
      $region37: #{omnivore_forward.1} parent=5 // pred_check
        _
      $region38: #{omnivore_forward.1} parent=5 // pred_check_branch
        %213 = sbr.rel (%p210) target = $region40
      $region39: #{omnivore_forward.1} parent=5 // pred_region
        %s214 = ssub.s32 %s14, 1
        %s215 = smul.u32 4, %s24
        %p216 = scmp.lt.s32.totalorder %s23, 1
        %s217 = scalar_select %p216, %s23, 1
        %p218 = scmp.lt.s32.totalorder %s215, 3
        %s219 = scalar_select %p218, %s215, 3
        %s220 = smul.addr %s217, 4
        %s221 = sadd.s32 %s219, %s220
        %s222 = smul.addr %s221, 8
        %s223 = scalar_lea.vmem %s0, %s222
        %p224 = pneg %p54
        %p225 = pneg %p51
        %p226 = pneg %p75
        %p227 = pneg %p72
        %p228 = pneg %p96
        %p229 = pneg %p93
        %p230 = pneg %p117
        %p231 = pneg %p114
        %p232 = pneg %p138
        %p233 = pneg %p135
        %p234 = pneg %p164
        %p235 = pneg %p161
        %s236 = sand.u32 %s151, 1
        %s237 = scalar_lea.sflag [#allocation4], %s236
        %s238 = sand.u32 %s151, 1
        %s239 = scalar_lea.vmem [#allocation3], %s238
        %s240 = smul.u32 4, %s24
        %p241 = scmp.lt.s32.totalorder %s23, 1
        %s242 = scalar_select %p241, %s23, 1
        %p243 = scmp.lt.s32.totalorder %s240, 3
        %s244 = scalar_select %p243, %s240, 3
        %s245 = smul.addr %s242, 4
        %s246 = sadd.s32 %s244, %s245
        %s247 = smul.addr %s246, 8
        %s248 = scalar_lea.vmem %s0, %s247
        %s249 = smul.u32 4, %s24
        %p250 = scmp.eq.s32.totalorder %s24, 0
        // Predicated region
        $region41: #{omnivore_forward.1} parent=39 // pred_check
          %p251 = pneg %p250
        $region42: #{omnivore_forward.1} parent=39 // pred_check_branch
          %253 = sbr.rel (%p251) target = $region44
        $region43: #{omnivore_forward.1} parent=39 // pred_region
          %254 = vst [vmem:[#allocation2] sm:$0xff] 0.0
          %255 = vst [vmem:[#allocation2 + $0x8] sm:$0xff] 0.0
          %256 = vst [vmem:[#allocation2 + $0x10] sm:$0xff] 0.0
          %257 = vst [vmem:[#allocation2 + $0x18] sm:$0xff] 0.0
        $region44: #{omnivore_forward.1} parent=39 // pred_fallthru
          _
        %v258 = vld [vmem:[#allocation2] sm:$0xff]
        %v259 = vld [vmem:[#allocation2 + $0x8] sm:$0xff]
        %v260 = vld [vmem:[#allocation2 + $0x10] sm:$0xff]
        %v261 = vld [vmem:[#allocation2 + $0x18] sm:$0xff]
        %v262 = vld [vmem:[%s248] sm:$0xff]
        %v263 = vld [vmem:[%s248 + $0x8] sm:$0xff]
        %v264 = vld [vmem:[%s248 + $0x10] sm:$0xff]
        %v265 = vld [vmem:[%s248 + $0x18] sm:$0xff]
        %v266 = vadd.f32 %v258, %v262
        %v267 = vadd.f32 %v259, %v263
        %v268 = vadd.f32 %v260, %v264
        %v269 = vadd.f32 %v261, %v265
        %270 = vst [vmem:[#allocation2] sm:$0xff] %v266
        %271 = vst [vmem:[#allocation2 + $0x8] sm:$0xff] %v267
        %272 = vst [vmem:[#allocation2 + $0x10] sm:$0xff] %v268
        %273 = vst [vmem:[#allocation2 + $0x18] sm:$0xff] %v269
        // Predicated region
        $region45: #{omnivore_forward.1} parent=39 // pred_check
          %p274 = pneg %p250
        $region46: #{omnivore_forward.1} parent=39 // pred_check_branch
          %276 = sbr.rel (%p274) target = $region48
        $region47: #{omnivore_forward.1} parent=39 // pred_region
          %v277 = vld [vmem:[#allocation2] sm:$0xff]
          %v278 = vld [vmem:[#allocation2 + $0x8] sm:$0xff]
          %v279 = vld [vmem:[#allocation2 + $0x10] sm:$0xff]
          %v280 = vld [vmem:[#allocation2 + $0x18] sm:$0xff]
          %v281 = vadd.f32 %v277, %v278
          %v282 = vadd.f32 %v281, %v279
          %v283 = vadd.f32 %v282, %v280
          %284 = vadd.xlane.f32.xlu0 %v283
          %v285 = vpop.xlane.xlu0 %284
          %v286 = vmul.f32 %v285, 0.0009765625
          %v287 = vld [vmem:[%s1] sm:$0xff]
          %v288 = vmul.f32 %v286, %v287
          %vm289 = vcmask 261120
          %v290 = vsel %vm289, %v288, 0.0
          %v291 = vrot.slane %v290, 4
          %v292 = vadd.f32 %v290, %v291
          %v293 = vrot.slane %v292, 2
          %v294 = vadd.f32 %v292, %v293
          %v295 = vrot.slane %v294, 1
          %v296 = vadd.f32 %v294, %v295
          %v297 = vld [vmem:[%s2] sm:$0x1]
          %v298 = vadd.f32 %v296, %v297
          %v299 = vld [vmem:[%s3] sm:$0xff]
          %v300 = vld [vmem:[%s3 + $0x8] sm:$0xff]
          %v301 = vld [vmem:[%s3 + $0x10] sm:$0xff]
          %v302 = vld [vmem:[%s3 + $0x18] sm:$0xff]
          %v303 = vld [vmem:[%s4] sm:$0x1]
          %v305 = vsel %vm289, %v298, 0
          %307 = vmatprep.subr.mxu0 0.0
          %308 = vmatpush1.msra.mxu0 0.0
          %309 = vmatprep.subr.mxu0 0.0
          %310 = vmatpush1.msra.mxu0 0.0
          %311 = vmatprep.subr.mxu0 0.0
          %312 = vmatpush1.msra.mxu0 0.0
          %313 = vmatprep.subr.mxu0 0.0
          %314 = vmatpush1.msra.mxu0 0.0
          %315 = vmatprep.subr.mxu0 0.0
          %316 = vmatpush1.msra.mxu0 0.0
          %317 = vmatprep.subr.mxu0 0.0
          %318 = vmatpush1.msra.mxu0 0.0
          %319 = vmatprep.subr.mxu0 0.0
          %320 = vmatpush1.msra.mxu0 0.0
          %321 = vmatprep.subr.mxu0 0.0
          %322 = vmatpush1.msra.mxu0 0.0
          %323 = vmatprep.subr.mxu0 0.0
          %324 = vmatpush1.msra.mxu0 0.0
          %325 = vmatprep.subr.mxu0 0.0
          %326 = vmatpush1.msra.mxu0 0.0
          %327 = vmatprep.subr.mxu0 0.0
          %328 = vmatpush1.msra.mxu0 0.0
          %329 = vmatprep.subr.mxu0 0.0
          %330 = vmatpush1.msra.mxu0 0.0
          %331 = vmatprep.subr.mxu0 0.0
          %332 = vmatpush1.msra.mxu0 %v302
          %333 = vmatprep.subr.mxu0 0.0
          %334 = vmatpush1.msra.mxu0 %v301
          %335 = vmatprep.subr.mxu0 0.0
          %336 = vmatpush1.msra.mxu0 %v300
          %337 = vmatprep.subr.mxu0 0.0
          %338 = vmatpush1.msra.mxu0 %v299
          %339 = vmatprep.subr.mxu0 0.0
          %340 = vmatpush2.msra.mxu0 0.0
          %341 = vmatprep.subr.mxu0 0.0
          %342 = vmatpush2.msra.mxu0 0.0
          %343 = vmatprep.subr.mxu0 0.0
          %344 = vmatpush2.msra.mxu0 0.0
          %345 = vmatprep.subr.mxu0 0.0
          %346 = vmatpush2.msra.mxu0 0.0
          %347 = vmatprep.subr.mxu0 0.0
          %348 = vmatpush2.msra.mxu0 0.0
          %349 = vmatprep.subr.mxu0 0.0
          %350 = vmatpush2.msra.mxu0 0.0
          %351 = vmatprep.subr.mxu0 0.0
          %352 = vmatpush2.msra.mxu0 0.0
          %353 = vmatprep.subr.mxu0 0.0
          %354 = vmatpush2.msra.mxu0 0.0
          %355 = vmatprep.subr.mxu0 0.0
          %356 = vmatpush2.msra.mxu0 0.0
          %357 = vmatprep.subr.mxu0 0.0
          %358 = vmatpush2.msra.mxu0 0.0
          %359 = vmatprep.subr.mxu0 0.0
          %360 = vmatpush2.msra.mxu0 0.0
          %361 = vmatprep.subr.mxu0 0.0
          %362 = vmatpush2.msra.mxu0 0.0
          %363 = vmatprep.subr.mxu0 0.0
          %364 = vmatpush2.msra.mxu0 0.0
          %365 = vmatprep.subr.mxu0 0.0
          %366 = vmatpush2.msra.mxu0 0.0
          %367 = vmatprep.subr.mxu0 0.0
          %368 = vmatpush2.msra.mxu0 0.0
          %369 = vmatprep.subr.mxu0 0.0
          %370 = vmatpush2.msra.mxu0 0.0
          %371 = vmatprep.mubr.f32.mxu0 0.0
          %372 = vmatmul.mubr.f32.gmra.mxu0 %v305
          %v373 = vpop.f32.mrf.mxu0
          %v374 = vadd.f32 %v303, %v373
          %v375 = vpop.f32.mrf.mxu0
          %376 = vdwg.mxu0
          %377 = vst [vmem:[%s239] sm:$0x1] %v374
        $region48: #{omnivore_forward.1} parent=39 // pred_fallthru
          _
        %s378 = sand.u32 %s151, 1
        %s379 = scalar_lea.sflag [#allocation4], %s378
        %s380 = sand.u32 %s151, 1
        %s381 = scalar_lea.vmem [#allocation3], %s380
        // Predicated region
        $region49: #{omnivore_forward.1} parent=39 // pred_check
          %p382 = pneg %p161
        $region50: #{omnivore_forward.1} parent=39 // pred_check_branch
          %384 = sbr.rel (%p382) target = $region52
        $region51: #{omnivore_forward.1} parent=39 // pred_region
          %s386 = ssub.s32 16, 16
          %387 = vsyncadd %s379, %s386
          %s388 = smul.addr %s23, 16
          %s389 = scalar_lea.hbm %s5, %s388
          %s391 = sshll.u32 %s381, 4
          %s392 = int_to_ptr.vmem [resolvable:$true] %s391
          %394 = dma.vmem_to_hbm [thread:$0]  %s392, 16, %s389, %s379
        $region52: #{omnivore_forward.1} parent=39 // pred_fallthru
          _
      $region40: #{omnivore_forward.1} parent=5 // pred_fallthru
        _
      %p395 = scmp.le.s32.totalorder 2, %s14
      // Predicated region
      $region53: #{omnivore_forward.1} parent=5 // pred_check
        %p396 = pneg %p395
      $region54: #{omnivore_forward.1} parent=5 // pred_check_branch
        %398 = sbr.rel (%p396) target = $region56
      $region55: #{omnivore_forward.1} parent=5 // pred_region
        %s399 = ssub.s32 %s14, 2
        // Predicated region
        $region57: #{omnivore_forward.1} parent=55 // pred_check
          %p400 = pneg %p167
        $region58: #{omnivore_forward.1} parent=55 // pred_check_branch
          %402 = sbr.rel (%p400) target = $region60
        $region59: #{omnivore_forward.1} parent=55 // pred_region
          %s403 = sand.u32 %s152, 1
          %s404 = scalar_lea.sflag [#allocation4], %s403
          %s405 = sand.u32 %s152, 1
          %s406 = scalar_lea.vmem [#allocation3], %s405
          %407 = dma.done %s404, 16
        $region60: #{omnivore_forward.1} parent=55 // pred_fallthru
          _
      $region56: #{omnivore_forward.1} parent=5 // pred_fallthru
        _
    $region6: #{omnivore_forward.1} parent=1 // loop_footer
      %s18 = sadd.s32 1, %s14
    $region7: #{omnivore_forward.1} parent=1 // loop_footer_branch
      %13 = sbr.rel target = $region3
    $region8: #{omnivore_forward.1} parent=1 // loop_exit
      _
    %408 = vsyncpa [#allocation4], 1
    %s409 = scalar_lea.sflag [#allocation4], 1
    %410 = vsyncpa %s409, 1

</llo_original>
